<compile_context>
chip_gen: v7x
topology: tpu7x:2x2x1
jax: 0.10.0
libtpu: 0.0.40
codegen_flags: <defaults>
</compile_context>

<pallas_src>
import functools

import jax
import jax.numpy as jnp
from jax import lax
from jax.experimental import pallas as pl
from jax.experimental.pallas import tpu as pltpu


def _round_up(x, m):
    return ((x + m - 1) // m) * m


def _round_down(x, m):
    return (x // m) * m


def _vmem_budget_bytes():
    # Physical VMEM differs per generation (128 MiB v5e/v6e, 64 MiB v7x);
    # leave ~25% headroom for compiler-internal scratch / double buffers.
    try:
        cap = int(pltpu.get_tpu_info().vmem_capacity_bytes)
    except Exception:
        cap = 64 * 1024 * 1024            # conservative (v7x-sized) fallback
    return (cap * 3) // 4


# ----------------------------------------------------------------------------
# Kernel 1: per-pixel cross entropy + per-class CE-sums / pixel counts.
# logits presented as (C, rows, 128) class planes -- every vreg fully lane-
# and sublane-dense for any C; pixel axis tiled with a "parallel" grid.
# ----------------------------------------------------------------------------
def ce_stats_kernel(pred_ref, tgt_ref, l_ref, ce_ref, cnt_ref):
    logits = pred_ref[...].astype(jnp.float32)               # (C, TR, 128)
    tgt = tgt_ref[...]                                        # (TR, 128) int32

    m = jnp.max(logits, axis=0)                               # (TR, 128)
    lse = jnp.log(jnp.sum(jnp.exp(logits - m[None]), axis=0))  # (TR, 128)

    cls = lax.broadcasted_iota(jnp.int32, logits.shape, 0)
    onehot = (cls == tgt[None]).astype(jnp.float32)           # (C, TR, 128)
    tgt_logit = jnp.sum(onehot * logits, axis=0)              # (TR, 128)

    # per-pixel CE (reduction='none'); padded pixels carry a sentinel class,
    # so their onehot is all-zero -> they never reach ce_ref / cnt_ref and
    # their L is sliced away in the wrapper.
    L = (m + lse) - tgt_logit
    l_ref[...] = L
    ce_ref[...] = jnp.sum(onehot * L[None], axis=1)[None]     # (1, C, 128)
    cnt_ref[...] = jnp.sum(onehot, axis=1)[None]              # (1, C, 128)


# ----------------------------------------------------------------------------
# Kernel 2: fused GapMat weight map + Tversky score.  The 3x3 (center=0) and
# 9x9 all-ones zero-padded convolutions are separable shift-and-add filters
# built from pltpu.roll (XLU); because the image is zero-padded by >= 4 rows
# below and >= 4 columns to the right, the roll wrap-around always sources a
# zero row/col and no boundary masks are needed.  W*L never leaves the chip.
# Inputs `skel` / `a2` come from host-side skeletonize / distance transform.
# ----------------------------------------------------------------------------
def gapmat_tversky_kernel(skel_ref, a2_ref, l_ref, tgt_ref, out_ref,
                          *, H, W, K, alpha, beta, eps):
    skel = skel_ref[...]                                      # (Hp, Wp) f32, 0 in pad
    a2 = a2_ref[...]                                          # (Hp, Wp) f32, 0 in pad
    L = l_ref[...]                                            # (Hp, Wp) f32, 0 in pad
    t = tgt_ref[...]                                          # (Hp, Wp) i32, sentinel in pad
    Hp, Wp = skel.shape
    f32 = jnp.float32

    def box_filter(x, r):
        # (2r+1)x(2r+1) all-ones zero-padded convolution, separable passes.
        acc = x
        for s in range(1, r + 1):
            acc = acc + pltpu.roll(x, shift=s, axis=0)        # row i-s -> i
            acc = acc + pltpu.roll(x, shift=Hp - s, axis=0)   # row i+s -> i
        y = acc
        out = y
        for s in range(1, r + 1):
            out = out + pltpu.roll(y, shift=s, axis=1)        # col j-s -> j
            out = out + pltpu.roll(y, shift=Wp - s, axis=1)   # col j+s -> j
        return out

    # 3x3 ones kernel with zero center == 3x3 box filter minus center
    box3 = box_filter(skel, 1)
    Cmat = skel * (box3 - skel)
    Cmat = jnp.where(Cmat == 1.0, 1.0, 0.0)

    # 9x9 all-ones kernel, padding=4 (counts are exact small integers in f32,
    # so the ==0 / ==1 tests below are exact)
    N9 = box_filter(Cmat, 4) * K
    W1 = N9 + jnp.where(N9 == 0.0, 1.0, 0.0)
    W1 = jnp.where(W1 == 1.0, 0.0, W1)

    W2 = a2 * W1
    Wmat = W2 + jnp.where(W2 == 0.0, 1.0, 0.0)
    wl = Wmat * L                                             # GapMat output (stays on-chip)

    # ---- Tversky on the single-channel GapMat output (B == 1 path of the
    # reference tversky_loss): the (1,2,1,H,W) probas tensor broadcasts
    # against the (1,2,H,W) one-hot tensor, reduced over dims (0,2,3) ->
    # per-column ratios, mean over the (2, W) tensor.  Binary-target path
    # (classes {0,1}) exactly as the reference.
    ri = lax.broadcasted_iota(jnp.int32, (Hp, Wp), 0)
    ci = lax.broadcasted_iota(jnp.int32, (Hp, Wp), 1)
    valid = ((ri < H) & (ci < W)).astype(f32)

    pos = 1.0 / (1.0 + jnp.exp(-wl))                          # exact sigmoid
    neg = 1.0 - pos
    tsum = ((t == 0).astype(f32) + (t == 1).astype(f32)) * valid

    def chan_ratio(p):                                        # (1, Wp)
        inter = jnp.sum(p * tsum, axis=0, keepdims=True)
        fps = jnp.sum(p * (2.0 - tsum) * valid, axis=0, keepdims=True)
        fns = jnp.sum((1.0 - p) * tsum, axis=0, keepdims=True)
        # exact divide for the final ratio; padded columns give 0/eps == 0
        return inter / (inter + alpha * fps + beta * fns + eps)

    s = (jnp.sum(chan_ratio(pos), keepdims=True)
         + jnp.sum(chan_ratio(neg), keepdims=True))           # (1, 1)
    out_ref[...] = s / (2.0 * W)                              # mean over (2, W_valid)


# ----------------------------------------------------------------------------
# Wrapper: glue (reshapes, scalar arithmetic) + pallas_call plumbing.
# ----------------------------------------------------------------------------
def bce_sac_forward(pred, target, skel, a2, *, num_classes, alpha, beta,
                    phi, cel, ftl, K):
    B, C, H, W = pred.shape
    assert B == 1, "reference GapMat broadcasting only defines batch=1 semantics"
    assert C == num_classes
    N = H * W

    vmem_budget = _vmem_budget_bytes()

    # ------------------ kernel 1: CE + per-class stats ---------------------
    in_itemsize = jnp.dtype(pred.dtype).itemsize
    # VMEM bytes per 128-pixel row of a tile: double-buffered inputs +
    # (C,TR,128) f32 in-kernel temporaries + a handful of (TR,128) rows.
    per_row = (2 * C * 128 * in_itemsize        # pred block, double-buffered
               + 3 * C * 128 * 4                # logits / exp / onehot temps
               + 12 * 128 * 4)                  # tgt, L, m, lse, outputs, ...
    budget_k1 = min(vmem_budget, 96 * 1024 * 1024)   # 48 MiB on v7x, 96 MiB v5e/v6e
    tr_cap = max(8, min(2048, _round_down(budget_k1 // per_row, 8)))

    rows_raw = -(-N // 128)
    G = max(1, -(-rows_raw // tr_cap))
    if rows_raw >= 32:
        G = max(G, 4)            # keep the DMA pipeline / both v7x cores fed
    TR = _round_up(-(-rows_raw // G), 8)
    rows = G * TR
    n_pad = rows * 128

    # B == 1 -> pure metadata reshape (no transpose, no dtype copy in HBM);
    # the kernel casts to f32 on-chip.
    pred2 = pred.reshape(C, N)
    tgt1 = target.reshape(N).astype(jnp.int32)
    if n_pad != N:
        pred2 = jnp.pad(pred2, ((0, 0), (0, n_pad - N)))
        # sentinel class C -> all-zero onehot -> padded pixels never counted
        tgt1 = jnp.pad(tgt1, (0, n_pad - N), constant_values=C)
    pred3 = pred2.reshape(C, rows, 128)
    tgt2 = tgt1.reshape(rows, 128)

    params_ce = pltpu.CompilerParams(
        dimension_semantics=("parallel",),
        vmem_limit_bytes=int(budget_k1))

    l_rows, ce_part, cnt_part = pl.pallas_call(
        ce_stats_kernel,
        out_shape=(
            jax.ShapeDtypeStruct((rows, 128), jnp.float32),
            jax.ShapeDtypeStruct((G, C, 128), jnp.float32),
            jax.ShapeDtypeStruct((G, C, 128), jnp.float32),
        ),
        grid=(G,),
        in_specs=[
            pl.BlockSpec((C, TR, 128), lambda i: (0, i, 0)),
            pl.BlockSpec((TR, 128), lambda i: (i, 0)),
        ],
        out_specs=(
            pl.BlockSpec((TR, 128), lambda i: (i, 0)),
            pl.BlockSpec((1, C, 128), lambda i: (i, 0, 0)),
            pl.BlockSpec((1, C, 128), lambda i: (i, 0, 0)),
        ),
        compiler_params=params_ce,
    )(pred3, tgt2)

    # BCE_SAC.weights(): class-frequency weights  w_c = 1 - count_c / total
    ce_c = jnp.sum(ce_part, axis=(0, 2))            # (C,)
    counts = jnp.sum(cnt_part, axis=(0, 2))         # (C,)
    wts = 1.0 - counts / jnp.sum(counts)
    # nn.CrossEntropyLoss(weight=w, reduction='mean'):
    #   sum_i w[y_i] * nll_i / sum_i w[y_i]
    ce_seg = jnp.sum(wts * ce_c) / jnp.sum(wts * counts)

    # ------------------ kernel 2: fused GapMat + Tversky -------------------
    # Zero-pad to lane/sublane-dense dims with >= 4 extra rows / cols so the
    # box filters need no boundary masks and stores are unmasked.
    Hp = _round_up(H + 4, 8)
    Wp = _round_up(W + 4, 128)

    l2d = l_rows.reshape(-1)[:N].reshape(H, W)
    tgt2d = target.reshape(H, W).astype(jnp.int32)

    def pad2d(x, cval=0):
        return jnp.pad(x, ((0, Hp - H), (0, Wp - W)), constant_values=cval)

    skel_p = pad2d(skel.astype(jnp.float32))
    a2_p = pad2d(a2.astype(jnp.float32))
    l_p = pad2d(l2d)
    tgt_p = pad2d(tgt2d, cval=num_classes)           # sentinel -> tsum == 0 in pad

    # TODO(synk): for very large images (>~1024^2 on v7x) this single-block
    # kernel should be band-tiled over rows with a 5-row halo (or the box
    # filters moved to MXU banded matmuls); not needed at the sizes used here.
    params_gm = pltpu.CompilerParams(
        dimension_semantics=("arbitrary",),
        vmem_limit_bytes=int(vmem_budget))

    score = pl.pallas_call(
        functools.partial(gapmat_tversky_kernel, H=H, W=W, K=float(K),
                          alpha=float(alpha), beta=float(beta), eps=1e-7),
        out_shape=jax.ShapeDtypeStruct((1, 1), jnp.float32),
        grid=(1,),
        in_specs=[pl.BlockSpec((Hp, Wp), lambda i: (0, 0)) for _ in range(4)],
        out_specs=pl.BlockSpec((1, 1), lambda i: (0, 0)),
        compiler_params=params_gm,
    )(skel_p, a2_p, l_p, tgt_p)

    tv = (1.0 - score[0, 0]) ** phi
    return cel * ce_seg + ftl * tv


if __name__ == "__main__":
    key = jax.random.PRNGKey(0)
    k1, k2, k3 = jax.random.split(key, 3)

    B, C, H, W = 1, 2, 16, 16            # binary segmentation (num_classes = 2)
    pred = jax.random.normal(k1, (B, C, H, W), dtype=jnp.float32)
    target = jax.random.randint(k2, (B, 1, H, W), 0, C, dtype=jnp.int32)

    # TODO(synk): scipy.ndimage.distance_transform_edt, cv2.normalize and
    # skimage.skeletonize inside GapMat are host-side CPU ops with no
    # Pallas/JAX equivalent; the binary skeleton and the normalized inverted
    # distance map are therefore taken as inputs (deterministic stand-ins).
    skel = (jnp.zeros((H, W), jnp.float32)
            .at[H // 2, :].set(1.0)
            .at[:, W // 2].set(1.0))
    a2 = jax.random.uniform(k3, (H, W), dtype=jnp.float32)

    loss = bce_sac_forward(
        pred, target, skel, a2,
        num_classes=C, alpha=0.7, beta=0.3, phi=0.75, cel=1.0, ftl=1.0, K=3)
    jax.block_until_ready(loss)
    print("KERNEL_OK")
</pallas_src>

<mosaic_0001>
module attributes {stable_mosaic.version = 11 : i64} {
  func.func @ce_stats_kernel(%arg0: i32, %arg1: memref<2x8x128xf32, #tpu.memory_space<vmem>>, %arg2: memref<8x128xi32, #tpu.memory_space<vmem>>, %arg3: memref<8x128xf32, #tpu.memory_space<vmem>>, %arg4: memref<1x2x128xf32, #tpu.memory_space<vmem>>, %arg5: memref<1x2x128xf32, #tpu.memory_space<vmem>>) attributes {dimension_semantics = [#tpu.dimension_semantics<parallel>], iteration_bounds = array<i64: 1>, scalar_prefetch = 0 : i64, scratch_operands = 0 : i64, tpu.core_type = #tpu.core_type<tc>, window_params = [{transform_indices = @transform_0, window_bounds = array<i64: 2, 8, 128>}, {transform_indices = @transform_1, window_bounds = array<i64: 8, 128>}, {transform_indices = @transform_2, window_bounds = array<i64: 8, 128>}, {transform_indices = @transform_3, window_bounds = array<i64: 1, 2, 128>}, {transform_indices = @transform_4, window_bounds = array<i64: 1, 2, 128>}]} {
    %c0 = arith.constant 0 : index
    %c0_0 = arith.constant 0 : index
    %c0_1 = arith.constant 0 : index
    %0 = vector.load %arg1[%c0, %c0_0, %c0_1] : memref<2x8x128xf32, #tpu.memory_space<vmem>>, vector<2x8x128xf32>
    %c0_2 = arith.constant 0 : index
    %c0_3 = arith.constant 0 : index
    %1 = vector.load %arg2[%c0_2, %c0_3] : memref<8x128xi32, #tpu.memory_space<vmem>>, vector<8x128xi32>
    %cst = arith.constant dense<0xFF800000> : vector<8x128xf32>
    %2 = vector.multi_reduction <maximumf>, %0, %cst [0] : vector<2x8x128xf32> to vector<8x128xf32>
    %3 = vector.shape_cast %2 : vector<8x128xf32> to vector<1x8x128xf32>
    %4 = vector.broadcast %3 : vector<1x8x128xf32> to vector<2x8x128xf32>
    %5 = arith.subf %0, %4 : vector<2x8x128xf32>
    %6 = math.exp %5 : vector<2x8x128xf32>
    %cst_4 = arith.constant dense<0.000000e+00> : vector<8x128xf32>
    %7 = vector.multi_reduction <add>, %6, %cst_4 [0] : vector<2x8x128xf32> to vector<8x128xf32>
    %8 = math.log %7 : vector<8x128xf32>
    %9 = tpu.iota {dimensions = array<i32: 0>} : vector<2x8x128xi32>
    %10 = vector.shape_cast %1 : vector<8x128xi32> to vector<1x8x128xi32>
    %11 = vector.broadcast %10 : vector<1x8x128xi32> to vector<2x8x128xi32>
    %12 = arith.cmpi eq, %9, %11 : vector<2x8x128xi32>
    %13 = arith.extui %12 : vector<2x8x128xi1> to vector<2x8x128xi32>
    %14 = arith.sitofp %13 : vector<2x8x128xi32> to vector<2x8x128xf32>
    %15 = arith.mulf %14, %0 : vector<2x8x128xf32>
    %cst_5 = arith.constant dense<0.000000e+00> : vector<8x128xf32>
    %16 = vector.multi_reduction <add>, %15, %cst_5 [0] : vector<2x8x128xf32> to vector<8x128xf32>
    %17 = arith.addf %2, %8 : vector<8x128xf32>
    %18 = arith.subf %17, %16 : vector<8x128xf32>
    %c0_6 = arith.constant 0 : index
    %c0_7 = arith.constant 0 : index
    %19 = vector.load %arg3[%c0_6, %c0_7] : memref<8x128xf32, #tpu.memory_space<vmem>>, vector<8x128xf32>
    tpu.vector_store %arg3[%c0_6, %c0_7], %18 {strides = array<i32>} : memref<8x128xf32, #tpu.memory_space<vmem>>, vector<8x128xf32>,
    %20 = vector.shape_cast %18 : vector<8x128xf32> to vector<1x8x128xf32>
    %21 = vector.broadcast %20 : vector<1x8x128xf32> to vector<2x8x128xf32>
    %22 = arith.mulf %14, %21 : vector<2x8x128xf32>
    %cst_8 = arith.constant dense<0.000000e+00> : vector<2x128xf32>
    %23 = vector.multi_reduction <add>, %22, %cst_8 [1] : vector<2x8x128xf32> to vector<2x128xf32>
    %24 = vector.shape_cast %23 : vector<2x128xf32> to vector<1x2x128xf32>
    %c0_9 = arith.constant 0 : index
    %c0_10 = arith.constant 0 : index
    %c0_11 = arith.constant 0 : index
    %25 = vector.load %arg4[%c0_9, %c0_10, %c0_11] : memref<1x2x128xf32, #tpu.memory_space<vmem>>, vector<1x2x128xf32>
    tpu.vector_store %arg4[%c0_9, %c0_10, %c0_11], %24 {strides = array<i32>} : memref<1x2x128xf32, #tpu.memory_space<vmem>>, vector<1x2x128xf32>,
    %cst_12 = arith.constant dense<0.000000e+00> : vector<2x128xf32>
    %26 = vector.multi_reduction <add>, %14, %cst_12 [1] : vector<2x8x128xf32> to vector<2x128xf32>
    %27 = vector.shape_cast %26 : vector<2x128xf32> to vector<1x2x128xf32>
    %c0_13 = arith.constant 0 : index
    %c0_14 = arith.constant 0 : index
    %c0_15 = arith.constant 0 : index
    %28 = vector.load %arg5[%c0_13, %c0_14, %c0_15] : memref<1x2x128xf32, #tpu.memory_space<vmem>>, vector<1x2x128xf32>
    tpu.vector_store %arg5[%c0_13, %c0_14, %c0_15], %27 {strides = array<i32>} : memref<1x2x128xf32, #tpu.memory_space<vmem>>, vector<1x2x128xf32>,
    return
  }
  func.func @transform_0(%arg0: i32) -> (i32, i32, i32) {
    %c0_i32 = arith.constant 0 : i32
    %c0_i32_0 = arith.constant 0 : i32
    %c0_i32_1 = arith.constant 0 : i32
    return %c0_i32, %arg0, %c0_i32_0 : i32, i32, i32
  }
  func.func @transform_1(%arg0: i32) -> (i32, i32) {
    %c0_i32 = arith.constant 0 : i32
    %c0_i32_0 = arith.constant 0 : i32
    return %arg0, %c0_i32 : i32, i32
  }
  func.func @transform_2(%arg0: i32) -> (i32, i32) {
    %c0_i32 = arith.constant 0 : i32
    %c0_i32_0 = arith.constant 0 : i32
    return %arg0, %c0_i32 : i32, i32
  }
  func.func @transform_3(%arg0: i32) -> (i32, i32, i32) {
    %c0_i32 = arith.constant 0 : i32
    %c0_i32_0 = arith.constant 0 : i32
    %c0_i32_1 = arith.constant 0 : i32
    return %arg0, %c0_i32, %c0_i32_0 : i32, i32, i32
  }
  func.func @transform_4(%arg0: i32) -> (i32, i32, i32) {
    %c0_i32 = arith.constant 0 : i32
    %c0_i32_0 = arith.constant 0 : i32
    %c0_i32_1 = arith.constant 0 : i32
    return %arg0, %c0_i32, %c0_i32_0 : i32, i32, i32
  }
}

</mosaic_0001>

<llo_original>
// kernel: tpu_custom_call.1
$region0: #{tpu_custom_call.1}
  #allocation0 [shape = 'u32[]', space=smem, size = 0x4, offset = 0x4, fixed_abs, tag = 'smem constant byte address 0x4 - core index']
  #allocation1 [shape = 'u32[144,128]{1,0:T(1,128)}', space=vmem, size = 0x12000, scoped, tag = 'internal scratch']
  %s0 = inlined_call_operand.hbm [shape: f32[2,8,128], index: 0, kind: input, shape index: {}]
  %s1 = inlined_call_operand.hbm [shape: s32[8,128], index: 1, kind: input, shape index: {}]
  %s2 = inlined_call_operand.hbm [shape: f32[8,128], index: 2, kind: output, shape index: {0}]
  %s3 = inlined_call_operand.hbm [shape: f32[1,2,128], index: 3, kind: output, shape index: {1}]
  %s4 = inlined_call_operand.hbm [shape: f32[1,2,128], index: 4, kind: output, shape index: {2}]
  %5 = xla_tuple %s2, %s3, %s4
  %s6 = sld [smem:[#allocation0]]
  $region42: #{tpu_custom_call.1} parent=0
    _
  %s8 = ssub.s32 1, %s6
  %s9 = scalar_select 0, %s8, %s6
  $region1: #{tpu_custom_call.1} parent=0
    #allocation2 [shape = 'u8[8192]{0}', space=vmem, size = 0x2000, scoped, tag = 'input window, operand 0, single buffered']
    #allocation3 [shape = 's32[1]{0}', space=sflag, size = 0x4, scoped, tag = 'scoped memory for tpu_custom_call.1']
    #allocation4 [shape = 's32[1]{0}', space=sflag, size = 0x4, scoped, tag = 'scoped memory for tpu_custom_call.1']
    #allocation5 [shape = 'u8[4096]{0}', space=vmem, size = 0x1000, scoped, tag = 'input window, operand 1, single buffered']
    #allocation6 [shape = 's32[1]{0}', space=sflag, size = 0x4, scoped, tag = 'scoped memory for tpu_custom_call.1']
    #allocation7 [shape = 'u8[4096]{0}', space=vmem, size = 0x1000, scoped, tag = 'output window, operand 0, single buffered']
    #allocation8 [shape = 'u8[1024]{0}', space=vmem, size = 0x400, scoped, tag = 'output window, operand 1, single buffered']
    #allocation9 [shape = 's32[1]{0}', space=sflag, size = 0x4, scoped, tag = 'scoped memory for tpu_custom_call.1']
    #allocation10 [shape = 'u8[1024]{0}', space=vmem, size = 0x400, scoped, tag = 'output window, operand 2, single buffered']
    %10 = vsyncpa [#allocation3], 0
    %11 = vsyncpa [#allocation6], 0
    %12 = vsyncpa [#allocation4], 0
    %13 = vsyncpa [#allocation9], 0
    // Predicated region
    $region2: #{tpu_custom_call.1} parent=1 // pred_check
      _
    $region3: #{tpu_custom_call.1} parent=1 // pred_check_branch
      %15 = sbr.rel (0) target = $region5
    $region4: #{tpu_custom_call.1} parent=1 // pred_region
      %s17 = ssub.s32 256, 256
      %18 = vsyncadd [#allocation3], %s17
      %s19 = sshll.u32 [#allocation2], 4
      %s20 = int_to_ptr.vmem [resolvable:$true] %s19
      %25 = dma.hbm_to_vmem [thread:$0]  %s0, 256, %s20, [#allocation3], 128, 128, 8
    $region5: #{tpu_custom_call.1} parent=1 // pred_fallthru
      _
    // Predicated region
    $region6: #{tpu_custom_call.1} parent=1 // pred_check
      _
    $region7: #{tpu_custom_call.1} parent=1 // pred_check_branch
      %27 = sbr.rel (0) target = $region9
    $region8: #{tpu_custom_call.1} parent=1 // pred_region
      %s29 = ssub.s32 128, 128
      %30 = vsyncadd [#allocation6], %s29
      %s32 = sshll.u32 [#allocation5], 4
      %s33 = int_to_ptr.vmem [resolvable:$true] %s32
      %35 = dma.hbm_to_vmem [thread:$0]  %s1, 128, %s33, [#allocation6]
    $region9: #{tpu_custom_call.1} parent=1 // pred_fallthru
      _
    // Predicated region
    $region10: #{tpu_custom_call.1} parent=1 // pred_check
      _
    $region11: #{tpu_custom_call.1} parent=1 // pred_check_branch
      %37 = sbr.rel (0) target = $region13
    $region12: #{tpu_custom_call.1} parent=1 // pred_region
      %38 = dma.done [#allocation3], 256
    $region13: #{tpu_custom_call.1} parent=1 // pred_fallthru
      _
    // Predicated region
    $region14: #{tpu_custom_call.1} parent=1 // pred_check
      _
    $region15: #{tpu_custom_call.1} parent=1 // pred_check_branch
      %40 = sbr.rel (0) target = $region17
    $region16: #{tpu_custom_call.1} parent=1 // pred_region
      %41 = dma.done [#allocation6], 128
    $region17: #{tpu_custom_call.1} parent=1 // pred_fallthru
      _
    %v42 = vld [vmem:[#allocation2] sm:$0xff]
    %v43 = vld [vmem:[#allocation2 + $0x8] sm:$0xff]
    %v44 = vld [vmem:[#allocation5] sm:$0xff]
    %v45 = vmax.f32 %v42, %v43
    %v46 = vsub.f32 %v42, %v45
    %v47 = vsub.f32 %v43, %v45
    %v48 = vmul.f32 %v46, 1.442695
    %v49 = vpow.pop %v48
    %v50 = vmul.f32 %v47, 1.442695
    %v51 = vpow.pop %v50
    %v52 = vadd.f32 %v49, %v51
    %v53 = vlog2.pop %v52
    %v54 = vmul.f32 %v53, 0.6931472
    %vm55 = vcmp.eq.s32.totalorder %v44, 0
    %vm56 = vcmp.eq.s32.totalorder %v44, 1
    %v57 = vsel %vm55, 1, 0
    %v58 = vsel %vm56, 1, 0
    %v59 = vcvt.s32.f32 %v57
    %v60 = vcvt.s32.f32 %v58
    %v61 = vmul.f32 %v59, %v42
    %v62 = vmul.f32 %v60, %v43
    %v63 = vadd.f32 %v61, %v62
    %v64 = vadd.f32 %v45, %v54
    %v65 = vsub.f32 %v64, %v63
    %66 = vst [vmem:[#allocation7] sm:$0xff] %v65
    %v67 = vmul.f32 %v59, %v65
    %v68 = vmul.f32 %v60, %v65
    %v69 = vrot.slane %v67, 4
    %v70 = vadd.f32 %v67, %v69
    %v71 = vrot.slane %v70, 2
    %v72 = vadd.f32 %v70, %v71
    %v73 = vrot.slane %v72, 1
    %v74 = vadd.f32 %v72, %v73
    %v75 = vrot.slane %v68, 4
    %v76 = vadd.f32 %v68, %v75
    %v77 = vrot.slane %v76, 2
    %v78 = vadd.f32 %v76, %v77
    %v79 = vrot.slane %v78, 1
    %v80 = vadd.f32 %v78, %v79
    %vm83 = vcmask 1041409
    %v84 = vsel %vm83, %v80, %v74
    %86 = vst [vmem:[#allocation8] sm:$0x3] %v84
    %v87 = vrot.slane %v59, 4
    %v88 = vadd.f32 %v59, %v87
    %v89 = vrot.slane %v88, 2
    %v90 = vadd.f32 %v88, %v89
    %v91 = vrot.slane %v90, 1
    %v92 = vadd.f32 %v90, %v91
    %v93 = vrot.slane %v60, 4
    %v94 = vadd.f32 %v60, %v93
    %v95 = vrot.slane %v94, 2
    %v96 = vadd.f32 %v94, %v95
    %v97 = vrot.slane %v96, 1
    %v98 = vadd.f32 %v96, %v97
    %v101 = vsel %vm83, %v98, %v92
    %103 = vst [vmem:[#allocation10] sm:$0x3] %v101
    // Predicated region
    $region18: #{tpu_custom_call.1} parent=1 // pred_check
      _
    $region19: #{tpu_custom_call.1} parent=1 // pred_check_branch
      %105 = sbr.rel (0) target = $region21
    $region20: #{tpu_custom_call.1} parent=1 // pred_region
      %s107 = ssub.s32 128, 128
      %108 = vsyncadd [#allocation4], %s107
      %s110 = sshll.u32 [#allocation7], 4
      %s111 = int_to_ptr.vmem [resolvable:$true] %s110
      %113 = dma.vmem_to_hbm [thread:$0]  %s111, 128, %s2, [#allocation4]
    $region21: #{tpu_custom_call.1} parent=1 // pred_fallthru
      _
    // Predicated region
    $region22: #{tpu_custom_call.1} parent=1 // pred_check
      _
    $region23: #{tpu_custom_call.1} parent=1 // pred_check_branch
      %115 = sbr.rel (0) target = $region25
    $region24: #{tpu_custom_call.1} parent=1 // pred_region
      %s117 = ssub.s32 32, 32
      %118 = vsyncadd [#allocation9], %s117
      %s120 = sshll.u32 [#allocation8], 4
      %s121 = int_to_ptr.vmem [resolvable:$true] %s120
      %123 = dma.vmem_to_hbm [thread:$0]  %s121, 32, %s3, [#allocation9]
    $region25: #{tpu_custom_call.1} parent=1 // pred_fallthru
      _
    // Predicated region
    $region26: #{tpu_custom_call.1} parent=1 // pred_check
      _
    $region27: #{tpu_custom_call.1} parent=1 // pred_check_branch
      %125 = sbr.rel (0) target = $region29
    $region28: #{tpu_custom_call.1} parent=1 // pred_region
      %s127 = ssub.s32 32, 32
      %128 = vsyncadd [#allocation9], %s127
      %s130 = sshll.u32 [#allocation10], 4
      %s131 = int_to_ptr.vmem [resolvable:$true] %s130
      %133 = dma.vmem_to_hbm [thread:$0]  %s131, 32, %s4, [#allocation9]
    $region29: #{tpu_custom_call.1} parent=1 // pred_fallthru
      _
    // Predicated region
    $region30: #{tpu_custom_call.1} parent=1 // pred_check
      _
    $region31: #{tpu_custom_call.1} parent=1 // pred_check_branch
      %135 = sbr.rel (0) target = $region33
    $region32: #{tpu_custom_call.1} parent=1 // pred_region
      %136 = dma.done [#allocation4], 128
    $region33: #{tpu_custom_call.1} parent=1 // pred_fallthru
      _
    // Predicated region
    $region34: #{tpu_custom_call.1} parent=1 // pred_check
      _
    $region35: #{tpu_custom_call.1} parent=1 // pred_check_branch
      %138 = sbr.rel (0) target = $region37
    $region36: #{tpu_custom_call.1} parent=1 // pred_region
      %139 = dma.done [#allocation9], 32
    $region37: #{tpu_custom_call.1} parent=1 // pred_fallthru
      _
    // Predicated region
    $region38: #{tpu_custom_call.1} parent=1 // pred_check
      _
    $region39: #{tpu_custom_call.1} parent=1 // pred_check_branch
      %141 = sbr.rel (0) target = $region41
    $region40: #{tpu_custom_call.1} parent=1 // pred_region
      %142 = dma.done [#allocation9], 32
    $region41: #{tpu_custom_call.1} parent=1 // pred_fallthru
      _
    %143 = vsyncpa [#allocation3], 1
    %144 = vsyncpa [#allocation6], 1
    %145 = vsyncpa [#allocation4], 1
    %146 = vsyncpa [#allocation9], 1

</llo_original>
